<compile_context>
chip_gen: v6e
topology: v6e:2x2x1
jax: 0.10.0
libtpu: 0.0.40
codegen_flags: <defaults>
</compile_context>

<pallas_src>
import functools

import jax
import jax.numpy as jnp
import numpy as np
from jax.experimental import pallas as pl
from jax.experimental.pallas import tpu as pltpu

_LANES = 128
_MAX_TILE_ROWS = 1024  # 1024 x 128 f32 = 512 KiB per operand block


def _round_up(x, m):
    return (x + m - 1) // m * m


def _bbox_transform_kernel(b_ref, d_ref, o_ref, *, mean, std):
    """One (TILE_R, 128) tile; lane j holds coordinate j % 4 of some anchor."""
    b = b_ref[...]          # boxes, interleaved x1,y1,x2,y2 along lanes
    d = d_ref[...]          # deltas, interleaved dx,dy,dw,dh along lanes
    rows, lanes = b.shape

    lane = jax.lax.broadcasted_iota(jnp.int32, (rows, lanes), 1)
    c = lane & 3                      # coordinate id 0..3 per lane
    is_lo = c < 2                     # lanes holding x1 / y1 (and dx / dy)
    is_x = (c & 1) == 0               # x-coordinate lanes (0, 2)

    # Compile-time per-lane std / mean (scalar literals selected by lane id).
    std_lane = jnp.where(is_lo,
                         jnp.where(is_x, std[0], std[1]),
                         jnp.where(is_x, std[2], std[3]))
    dsc = d * std_lane
    if any(m != 0.0 for m in mean):
        mean_lane = jnp.where(is_lo,
                              jnp.where(is_x, mean[0], mean[1]),
                              jnp.where(is_x, mean[2], mean[3]))
        dsc = dsc + mean_lane

    # swap2: exchange lanes {0,1} <-> {2,3} within each group of 4 lanes.
    # Two lane rotations on the XLU; the wrapped lanes of each rotation are
    # exactly the ones masked off by the select (4 divides 128).
    def swap2(x):
        return jnp.where(is_lo,
                         pltpu.roll(x, lanes - 2, 1),   # x[l + 2] at lo lanes
                         pltpu.roll(x, 2, 1))           # x[l - 2] at hi lanes

    b_sw = swap2(b)      # partner coord (x2/y2 at lo lanes, x1/y1 at hi lanes)
    d_sw = swap2(dsc)    # partner delta (dw/dh at lo lanes, dx/dy at hi lanes)

    size = jnp.where(is_lo, b_sw - b, b - b_sw)   # width at x lanes, height at y
    lo = jnp.where(is_lo, b, b_sw)                # x1 / y1 at every lane
    ctr = lo + 0.5 * size                         # ctr_x / ctr_y at every lane

    d_ctr = jnp.where(is_lo, dsc, d_sw)           # dx / dy at every lane
    d_size = jnp.where(is_lo, d_sw, dsc)          # dw / dh at every lane

    pred_ctr = ctr + d_ctr * size
    # TODO(synk): no dw/dh clamp here — matches the reference module exactly.
    pred_size = jnp.exp(d_size) * size

    half = jnp.where(is_lo, -0.5, 0.5)
    o_ref[...] = pred_ctr + half * pred_size


def bbox_transform(boxes, deltas, mean=None, std=None):
    """boxes, deltas: (B, N, 4) -> pred_boxes: (B, N, 4) float32."""
    if mean is None:
        mean = (0.0, 0.0, 0.0, 0.0)
    if std is None:
        std = (0.1, 0.1, 0.2, 0.2)
    mean = tuple(float(v) for v in np.asarray(mean).reshape(-1))
    std = tuple(float(v) for v in np.asarray(std).reshape(-1))
    assert len(mean) == 4 and len(std) == 4

    B, N, C = boxes.shape
    assert C == 4, "expected last dim of 4 (x1, y1, x2, y2)"

    flat = B * N * 4
    rows_needed = -(-flat // _LANES)
    tile_rows = min(_MAX_TILE_ROWS, _round_up(rows_needed, 8))
    rows = _round_up(rows_needed, tile_rows)
    pad = rows * _LANES - flat

    # Free views (no transpose): (B, N, 4) -> (flat,) -> (rows, 128).
    b_flat = boxes.astype(jnp.float32).reshape(flat)
    d_flat = deltas.astype(jnp.float32).reshape(flat)
    if pad:
        b_flat = jnp.pad(b_flat, (0, pad))
        d_flat = jnp.pad(d_flat, (0, pad))
    b2 = b_flat.reshape(rows, _LANES)
    d2 = d_flat.reshape(rows, _LANES)

    kernel = functools.partial(_bbox_transform_kernel, mean=mean, std=std)
    out2 = pl.pallas_call(
        kernel,
        out_shape=jax.ShapeDtypeStruct((rows, _LANES), jnp.float32),
        grid_spec=pl.GridSpec(
            grid=(rows // tile_rows,),
            in_specs=[
                pl.BlockSpec((tile_rows, _LANES), lambda i: (i, 0)),
                pl.BlockSpec((tile_rows, _LANES), lambda i: (i, 0)),
            ],
            out_specs=pl.BlockSpec((tile_rows, _LANES), lambda i: (i, 0)),
        ),
        compiler_params=pltpu.CompilerParams(
            dimension_semantics=("parallel",)),
    )(b2, d2)

    out = out2.reshape(rows * _LANES)
    if pad:
        out = out[:flat]
    return out.reshape(B, N, 4)


def _bbox_transform_ref(boxes, deltas, mean, std):
    widths = boxes[:, :, 2] - boxes[:, :, 0]
    heights = boxes[:, :, 3] - boxes[:, :, 1]
    ctr_x = boxes[:, :, 0] + 0.5 * widths
    ctr_y = boxes[:, :, 1] + 0.5 * heights
    dx = deltas[:, :, 0] * std[0] + mean[0]
    dy = deltas[:, :, 1] * std[1] + mean[1]
    dw = deltas[:, :, 2] * std[2] + mean[2]
    dh = deltas[:, :, 3] * std[3] + mean[3]
    pred_ctr_x = ctr_x + dx * widths
    pred_ctr_y = ctr_y + dy * heights
    pred_w = jnp.exp(dw) * widths
    pred_h = jnp.exp(dh) * heights
    return jnp.stack(
        [pred_ctr_x - 0.5 * pred_w,
         pred_ctr_y - 0.5 * pred_h,
         pred_ctr_x + 0.5 * pred_w,
         pred_ctr_y + 0.5 * pred_h], axis=2)


if __name__ == "__main__":
    key = jax.random.PRNGKey(0)
    kb, kw, kd = jax.random.split(key, 3)

    B, N = 2, 2048  # anchors; 4 coords interleaved along the lane axis

    # valid boxes (x1 < x2, y1 < y2)
    xy1 = jax.random.uniform(kb, (B, N, 2), jnp.float32, 0.0, 50.0)
    wh = jax.random.uniform(kw, (B, N, 2), jnp.float32, 1.0, 30.0)
    boxes = jnp.concatenate([xy1, xy1 + wh], axis=-1)          # (B, N, 4)
    deltas = jax.random.normal(kd, (B, N, 4), jnp.float32)     # (B, N, 4)

    mean = jnp.array([0.0, 0.0, 0.0, 0.0], jnp.float32)
    std = jnp.array([0.1, 0.1, 0.2, 0.2], jnp.float32)

    pred = jax.block_until_ready(bbox_transform(boxes, deltas))
    ref = _bbox_transform_ref(boxes, deltas, mean, std)

    assert pred.shape == (B, N, 4) and pred.dtype == jnp.float32
    assert jnp.allclose(pred, ref, rtol=1e-5, atol=1e-4), (
        float(jnp.max(jnp.abs(pred - ref))))

    print("KERNEL_OK")
</pallas_src>

<mosaic_0001>
module attributes {stable_mosaic.version = 11 : i64} {
  func.func @_bbox_transform_kernel(%arg0: i32, %arg1: memref<128x128xf32, #tpu.memory_space<vmem>>, %arg2: memref<128x128xf32, #tpu.memory_space<vmem>>, %arg3: memref<128x128xf32, #tpu.memory_space<vmem>>) attributes {dimension_semantics = [#tpu.dimension_semantics<parallel>], iteration_bounds = array<i64: 1>, scalar_prefetch = 0 : i64, scratch_operands = 0 : i64, tpu.core_type = #tpu.core_type<tc>, window_params = [{transform_indices = @transform_0, window_bounds = array<i64: 128, 128>}, {transform_indices = @transform_1, window_bounds = array<i64: 128, 128>}, {transform_indices = @transform_2, window_bounds = array<i64: 128, 128>}]} {
    %c0 = arith.constant 0 : index
    %c0_0 = arith.constant 0 : index
    %0 = vector.load %arg1[%c0, %c0_0] : memref<128x128xf32, #tpu.memory_space<vmem>>, vector<128x128xf32>
    %c0_1 = arith.constant 0 : index
    %c0_2 = arith.constant 0 : index
    %1 = vector.load %arg2[%c0_1, %c0_2] : memref<128x128xf32, #tpu.memory_space<vmem>>, vector<128x128xf32>
    %2 = tpu.iota {dimensions = array<i32: 1>} : vector<128x128xi32>
    %c3_i32 = arith.constant 3 : i32
    %3 = vector.broadcast %c3_i32 : i32 to vector<128x128xi32>
    %4 = arith.andi %2, %3 : vector<128x128xi32>
    %c2_i32 = arith.constant 2 : i32
    %5 = vector.broadcast %c2_i32 : i32 to vector<128x128xi32>
    %6 = arith.cmpi slt, %4, %5 : vector<128x128xi32>
    %c1_i32 = arith.constant 1 : i32
    %7 = vector.broadcast %c1_i32 : i32 to vector<128x128xi32>
    %8 = arith.andi %4, %7 : vector<128x128xi32>
    %c0_i32 = arith.constant 0 : i32
    %9 = vector.broadcast %c0_i32 : i32 to vector<128x128xi32>
    %10 = arith.cmpi eq, %8, %9 : vector<128x128xi32>
    %cst = arith.constant 1.000000e-01 : f32
    %cst_3 = arith.constant 1.000000e-01 : f32
    %11 = vector.broadcast %cst : f32 to vector<128x128xf32>
    %12 = vector.broadcast %cst_3 : f32 to vector<128x128xf32>
    %13 = arith.select %10, %11, %12 : vector<128x128xi1>, vector<128x128xf32>
    %cst_4 = arith.constant 2.000000e-01 : f32
    %cst_5 = arith.constant 2.000000e-01 : f32
    %14 = vector.broadcast %cst_4 : f32 to vector<128x128xf32>
    %15 = vector.broadcast %cst_5 : f32 to vector<128x128xf32>
    %16 = arith.select %10, %14, %15 : vector<128x128xi1>, vector<128x128xf32>
    %17 = arith.select %6, %13, %16 : vector<128x128xi1>, vector<128x128xf32>
    %18 = arith.mulf %1, %17 : vector<128x128xf32>
    %c126_i32 = arith.constant 126 : i32
    %19 = tpu.dynamic_rotate %0 by %c126_i32 dim 1 : vector<128x128xf32>, i32 -> vector<128x128xf32>
    %c2_i32_6 = arith.constant 2 : i32
    %20 = tpu.dynamic_rotate %0 by %c2_i32_6 dim 1 : vector<128x128xf32>, i32 -> vector<128x128xf32>
    %21 = arith.select %6, %19, %20 : vector<128x128xi1>, vector<128x128xf32>
    %c126_i32_7 = arith.constant 126 : i32
    %22 = tpu.dynamic_rotate %18 by %c126_i32_7 dim 1 : vector<128x128xf32>, i32 -> vector<128x128xf32>
    %c2_i32_8 = arith.constant 2 : i32
    %23 = tpu.dynamic_rotate %18 by %c2_i32_8 dim 1 : vector<128x128xf32>, i32 -> vector<128x128xf32>
    %24 = arith.select %6, %22, %23 : vector<128x128xi1>, vector<128x128xf32>
    %25 = arith.subf %21, %0 : vector<128x128xf32>
    %26 = arith.subf %0, %21 : vector<128x128xf32>
    %27 = arith.select %6, %25, %26 : vector<128x128xi1>, vector<128x128xf32>
    %28 = arith.select %6, %0, %21 : vector<128x128xi1>, vector<128x128xf32>
    %cst_9 = arith.constant 5.000000e-01 : f32
    %29 = vector.broadcast %cst_9 : f32 to vector<128x128xf32>
    %30 = arith.mulf %29, %27 : vector<128x128xf32>
    %31 = arith.addf %28, %30 : vector<128x128xf32>
    %32 = arith.select %6, %18, %24 : vector<128x128xi1>, vector<128x128xf32>
    %33 = arith.select %6, %24, %18 : vector<128x128xi1>, vector<128x128xf32>
    %34 = arith.mulf %32, %27 : vector<128x128xf32>
    %35 = arith.addf %31, %34 : vector<128x128xf32>
    %36 = math.exp %33 : vector<128x128xf32>
    %37 = arith.mulf %36, %27 : vector<128x128xf32>
    %cst_10 = arith.constant -5.000000e-01 : f32
    %cst_11 = arith.constant 5.000000e-01 : f32
    %38 = vector.broadcast %cst_10 : f32 to vector<128x128xf32>
    %39 = vector.broadcast %cst_11 : f32 to vector<128x128xf32>
    %40 = arith.select %6, %38, %39 : vector<128x128xi1>, vector<128x128xf32>
    %41 = arith.mulf %40, %37 : vector<128x128xf32>
    %42 = arith.addf %35, %41 : vector<128x128xf32>
    %c0_12 = arith.constant 0 : index
    %c0_13 = arith.constant 0 : index
    %43 = vector.load %arg3[%c0_12, %c0_13] : memref<128x128xf32, #tpu.memory_space<vmem>>, vector<128x128xf32>
    tpu.vector_store %arg3[%c0_12, %c0_13], %42 {strides = array<i32>} : memref<128x128xf32, #tpu.memory_space<vmem>>, vector<128x128xf32>,
    return
  }
  func.func @transform_0(%arg0: i32) -> (i32, i32) {
    %c0_i32 = arith.constant 0 : i32
    %c0_i32_0 = arith.constant 0 : i32
    return %arg0, %c0_i32 : i32, i32
  }
  func.func @transform_1(%arg0: i32) -> (i32, i32) {
    %c0_i32 = arith.constant 0 : i32
    %c0_i32_0 = arith.constant 0 : i32
    return %arg0, %c0_i32 : i32, i32
  }
  func.func @transform_2(%arg0: i32) -> (i32, i32) {
    %c0_i32 = arith.constant 0 : i32
    %c0_i32_0 = arith.constant 0 : i32
    return %arg0, %c0_i32 : i32, i32
  }
}

</mosaic_0001>

<llo_original>
// kernel: tpu_custom_call.1
$region0: #{tpu_custom_call.1}
  #allocation0 [shape = 'u32[]', space=smem, size = 0x4, offset = 0x4, fixed_abs, tag = 'smem constant byte address 0x4 - core index']
  #allocation1 [shape = 'u32[144,128]{1,0:T(1,128)}', space=vmem, size = 0x12000, scoped, tag = 'internal scratch']
  %s0 = inlined_call_operand.hbm [shape: f32[128,128], index: 0, kind: input, shape index: {}]
  %s1 = inlined_call_operand.hbm [shape: f32[128,128], index: 1, kind: input, shape index: {}]
  %s2 = inlined_call_operand.hbm [shape: f32[128,128], index: 2, kind: output, shape index: {}]
  %s3 = sld [smem:[#allocation0]]
  $region26: #{tpu_custom_call.1} parent=0
    _
  %s5 = ssub.s32 1, %s3
  %s6 = scalar_select 0, %s5, %s3
  $region1: #{tpu_custom_call.1} parent=0
    #allocation2 [shape = 'u8[65536]{0}', space=vmem, size = 0x10000, scoped, tag = 'input window, operand 0, single buffered']
    #allocation3 [shape = 's32[1]{0}', space=sflag, size = 0x4, scoped, tag = 'scoped memory for tpu_custom_call.1']
    #allocation4 [shape = 's32[1]{0}', space=sflag, size = 0x4, scoped, tag = 'scoped memory for tpu_custom_call.1']
    #allocation5 [shape = 'u8[65536]{0}', space=vmem, size = 0x10000, scoped, tag = 'input window, operand 1, single buffered']
    #allocation6 [shape = 's32[1]{0}', space=sflag, size = 0x4, scoped, tag = 'scoped memory for tpu_custom_call.1']
    #allocation7 [shape = 'u8[65536]{0}', space=vmem, size = 0x10000, scoped, tag = 'output window, operand 0, single buffered']
    %7 = vsyncpa [#allocation3], 0
    %8 = vsyncpa [#allocation6], 0
    %9 = vsyncpa [#allocation4], 0
    // Predicated region
    $region2: #{tpu_custom_call.1} parent=1 // pred_check
      _
    $region3: #{tpu_custom_call.1} parent=1 // pred_check_branch
      %11 = sbr.rel (0) target = $region5
    $region4: #{tpu_custom_call.1} parent=1 // pred_region
      %s13 = ssub.s32 2048, 2048
      %14 = vsyncadd [#allocation3], %s13
      %s15 = sshll.u32 [#allocation2], 4
      %s16 = int_to_ptr.vmem [resolvable:$true] %s15
      %21 = dma.hbm_to_vmem [thread:$0]  %s0, 2048, %s16, [#allocation3], 128, 128, 8
    $region5: #{tpu_custom_call.1} parent=1 // pred_fallthru
      _
    // Predicated region
    $region6: #{tpu_custom_call.1} parent=1 // pred_check
      _
    $region7: #{tpu_custom_call.1} parent=1 // pred_check_branch
      %23 = sbr.rel (0) target = $region9
    $region8: #{tpu_custom_call.1} parent=1 // pred_region
      %s25 = ssub.s32 2048, 2048
      %26 = vsyncadd [#allocation6], %s25
      %s27 = sshll.u32 [#allocation5], 4
      %s28 = int_to_ptr.vmem [resolvable:$true] %s27
      %33 = dma.hbm_to_vmem [thread:$0]  %s1, 2048, %s28, [#allocation6], 128, 128, 8
    $region9: #{tpu_custom_call.1} parent=1 // pred_fallthru
      _
    // Predicated region
    $region10: #{tpu_custom_call.1} parent=1 // pred_check
      _
    $region11: #{tpu_custom_call.1} parent=1 // pred_check_branch
      %35 = sbr.rel (0) target = $region13
    $region12: #{tpu_custom_call.1} parent=1 // pred_region
      %36 = dma.done [#allocation3], 2048
    $region13: #{tpu_custom_call.1} parent=1 // pred_fallthru
      _
    // Predicated region
    $region14: #{tpu_custom_call.1} parent=1 // pred_check
      _
    $region15: #{tpu_custom_call.1} parent=1 // pred_check_branch
      %38 = sbr.rel (0) target = $region17
    $region16: #{tpu_custom_call.1} parent=1 // pred_region
      %39 = dma.done [#allocation6], 2048
    $region17: #{tpu_custom_call.1} parent=1 // pred_fallthru
      _
    %v40 = vld [vmem:[#allocation2] sm:$0xff]
    %v41 = vld [vmem:[#allocation2 + $0x8] sm:$0xff]
    %v42 = vld [vmem:[#allocation2 + $0x10] sm:$0xff]
    %v43 = vld [vmem:[#allocation2 + $0x18] sm:$0xff]
    %v44 = vld [vmem:[#allocation2 + $0x20] sm:$0xff]
    %v45 = vld [vmem:[#allocation2 + $0x28] sm:$0xff]
    %v46 = vld [vmem:[#allocation2 + $0x30] sm:$0xff]
    %v47 = vld [vmem:[#allocation2 + $0x38] sm:$0xff]
    %v48 = vld [vmem:[#allocation2 + $0x40] sm:$0xff]
    %v49 = vld [vmem:[#allocation2 + $0x48] sm:$0xff]
    %v50 = vld [vmem:[#allocation2 + $0x50] sm:$0xff]
    %v51 = vld [vmem:[#allocation2 + $0x58] sm:$0xff]
    %v52 = vld [vmem:[#allocation2 + $0x60] sm:$0xff]
    %v53 = vld [vmem:[#allocation2 + $0x68] sm:$0xff]
    %v54 = vld [vmem:[#allocation2 + $0x70] sm:$0xff]
    %v55 = vld [vmem:[#allocation2 + $0x78] sm:$0xff]
    %v56 = vld [vmem:[#allocation5] sm:$0xff]
    %v57 = vld [vmem:[#allocation5 + $0x8] sm:$0xff]
    %v58 = vld [vmem:[#allocation5 + $0x10] sm:$0xff]
    %v59 = vld [vmem:[#allocation5 + $0x18] sm:$0xff]
    %v60 = vld [vmem:[#allocation5 + $0x20] sm:$0xff]
    %v61 = vld [vmem:[#allocation5 + $0x28] sm:$0xff]
    %v62 = vld [vmem:[#allocation5 + $0x30] sm:$0xff]
    %v63 = vld [vmem:[#allocation5 + $0x38] sm:$0xff]
    %v64 = vld [vmem:[#allocation5 + $0x40] sm:$0xff]
    %v65 = vld [vmem:[#allocation5 + $0x48] sm:$0xff]
    %v66 = vld [vmem:[#allocation5 + $0x50] sm:$0xff]
    %v67 = vld [vmem:[#allocation5 + $0x58] sm:$0xff]
    %v68 = vld [vmem:[#allocation5 + $0x60] sm:$0xff]
    %v69 = vld [vmem:[#allocation5 + $0x68] sm:$0xff]
    %v70 = vld [vmem:[#allocation5 + $0x70] sm:$0xff]
    %v71 = vld [vmem:[#allocation5 + $0x78] sm:$0xff]
    %v72 = vlaneseq
    %v73 = vand.u32 %v72, 127
    %v74 = vand.u32 %v73, 3
    %vm75 = vcmp.lt.s32.totalorder %v74, 2
    %v76 = vsel %vm75, 0.1, 0.2
    %v77 = vmul.f32 %v56, %v76
    %v78 = vmul.f32 %v57, %v76
    %v79 = vmul.f32 %v58, %v76
    %v80 = vmul.f32 %v59, %v76
    %v81 = vmul.f32 %v60, %v76
    %v82 = vmul.f32 %v61, %v76
    %v83 = vmul.f32 %v62, %v76
    %v84 = vmul.f32 %v63, %v76
    %v85 = vmul.f32 %v64, %v76
    %v86 = vmul.f32 %v65, %v76
    %v87 = vmul.f32 %v66, %v76
    %v88 = vmul.f32 %v67, %v76
    %v89 = vmul.f32 %v68, %v76
    %v90 = vmul.f32 %v69, %v76
    %v91 = vmul.f32 %v70, %v76
    %v92 = vmul.f32 %v71, %v76
    %93 = vrot.lane.b32.xlu0 %v40, 126
    %v94 = vpop.permute.xlu0 %93
    %95 = vrot.lane.b32.xlu0 %v41, 126
    %v96 = vpop.permute.xlu0 %95
    %97 = vrot.lane.b32.xlu0 %v42, 126
    %v98 = vpop.permute.xlu0 %97
    %99 = vrot.lane.b32.xlu0 %v43, 126
    %v100 = vpop.permute.xlu0 %99
    %101 = vrot.lane.b32.xlu0 %v44, 126
    %v102 = vpop.permute.xlu0 %101
    %103 = vrot.lane.b32.xlu0 %v45, 126
    %v104 = vpop.permute.xlu0 %103
    %105 = vrot.lane.b32.xlu0 %v46, 126
    %v106 = vpop.permute.xlu0 %105
    %107 = vrot.lane.b32.xlu0 %v47, 126
    %v108 = vpop.permute.xlu0 %107
    %109 = vrot.lane.b32.xlu0 %v48, 126
    %v110 = vpop.permute.xlu0 %109
    %111 = vrot.lane.b32.xlu0 %v49, 126
    %v112 = vpop.permute.xlu0 %111
    %113 = vrot.lane.b32.xlu0 %v50, 126
    %v114 = vpop.permute.xlu0 %113
    %115 = vrot.lane.b32.xlu0 %v51, 126
    %v116 = vpop.permute.xlu0 %115
    %117 = vrot.lane.b32.xlu0 %v52, 126
    %v118 = vpop.permute.xlu0 %117
    %119 = vrot.lane.b32.xlu0 %v53, 126
    %v120 = vpop.permute.xlu0 %119
    %121 = vrot.lane.b32.xlu0 %v54, 126
    %v122 = vpop.permute.xlu0 %121
    %123 = vrot.lane.b32.xlu0 %v55, 126
    %v124 = vpop.permute.xlu0 %123
    %125 = vrot.lane.b32.xlu0 %v40, 2
    %v126 = vpop.permute.xlu0 %125
    %127 = vrot.lane.b32.xlu0 %v41, 2
    %v128 = vpop.permute.xlu0 %127
    %129 = vrot.lane.b32.xlu0 %v42, 2
    %v130 = vpop.permute.xlu0 %129
    %131 = vrot.lane.b32.xlu0 %v43, 2
    %v132 = vpop.permute.xlu0 %131
    %133 = vrot.lane.b32.xlu0 %v44, 2
    %v134 = vpop.permute.xlu0 %133
    %135 = vrot.lane.b32.xlu0 %v45, 2
    %v136 = vpop.permute.xlu0 %135
    %137 = vrot.lane.b32.xlu0 %v46, 2
    %v138 = vpop.permute.xlu0 %137
    %139 = vrot.lane.b32.xlu0 %v47, 2
    %v140 = vpop.permute.xlu0 %139
    %141 = vrot.lane.b32.xlu0 %v48, 2
    %v142 = vpop.permute.xlu0 %141
    %143 = vrot.lane.b32.xlu0 %v49, 2
    %v144 = vpop.permute.xlu0 %143
    %145 = vrot.lane.b32.xlu0 %v50, 2
    %v146 = vpop.permute.xlu0 %145
    %147 = vrot.lane.b32.xlu0 %v51, 2
    %v148 = vpop.permute.xlu0 %147
    %149 = vrot.lane.b32.xlu0 %v52, 2
    %v150 = vpop.permute.xlu0 %149
    %151 = vrot.lane.b32.xlu0 %v53, 2
    %v152 = vpop.permute.xlu0 %151
    %153 = vrot.lane.b32.xlu0 %v54, 2
    %v154 = vpop.permute.xlu0 %153
    %155 = vrot.lane.b32.xlu0 %v55, 2
    %v156 = vpop.permute.xlu0 %155
    %v157 = vsel %vm75, %v94, %v126
    %v158 = vsel %vm75, %v96, %v128
    %v159 = vsel %vm75, %v98, %v130
    %v160 = vsel %vm75, %v100, %v132
    %v161 = vsel %vm75, %v102, %v134
    %v162 = vsel %vm75, %v104, %v136
    %v163 = vsel %vm75, %v106, %v138
    %v164 = vsel %vm75, %v108, %v140
    %v165 = vsel %vm75, %v110, %v142
    %v166 = vsel %vm75, %v112, %v144
    %v167 = vsel %vm75, %v114, %v146
    %v168 = vsel %vm75, %v116, %v148
    %v169 = vsel %vm75, %v118, %v150
    %v170 = vsel %vm75, %v120, %v152
    %v171 = vsel %vm75, %v122, %v154
    %v172 = vsel %vm75, %v124, %v156
    %173 = vrot.lane.b32.xlu0 %v77, 126
    %v174 = vpop.permute.xlu0 %173
    %175 = vrot.lane.b32.xlu0 %v78, 126
    %v176 = vpop.permute.xlu0 %175
    %177 = vrot.lane.b32.xlu0 %v79, 126
    %v178 = vpop.permute.xlu0 %177
    %179 = vrot.lane.b32.xlu0 %v80, 126
    %v180 = vpop.permute.xlu0 %179
    %181 = vrot.lane.b32.xlu0 %v81, 126
    %v182 = vpop.permute.xlu0 %181
    %183 = vrot.lane.b32.xlu0 %v82, 126
    %v184 = vpop.permute.xlu0 %183
    %185 = vrot.lane.b32.xlu0 %v83, 126
    %v186 = vpop.permute.xlu0 %185
    %187 = vrot.lane.b32.xlu0 %v84, 126
    %v188 = vpop.permute.xlu0 %187
    %189 = vrot.lane.b32.xlu0 %v85, 126
    %v190 = vpop.permute.xlu0 %189
    %191 = vrot.lane.b32.xlu0 %v86, 126
    %v192 = vpop.permute.xlu0 %191
    %193 = vrot.lane.b32.xlu0 %v87, 126
    %v194 = vpop.permute.xlu0 %193
    %195 = vrot.lane.b32.xlu0 %v88, 126
    %v196 = vpop.permute.xlu0 %195
    %197 = vrot.lane.b32.xlu0 %v89, 126
    %v198 = vpop.permute.xlu0 %197
    %199 = vrot.lane.b32.xlu0 %v90, 126
    %v200 = vpop.permute.xlu0 %199
    %201 = vrot.lane.b32.xlu0 %v91, 126
    %v202 = vpop.permute.xlu0 %201
    %203 = vrot.lane.b32.xlu0 %v92, 126
    %v204 = vpop.permute.xlu0 %203
    %205 = vrot.lane.b32.xlu0 %v77, 2
    %v206 = vpop.permute.xlu0 %205
    %207 = vrot.lane.b32.xlu0 %v78, 2
    %v208 = vpop.permute.xlu0 %207
    %209 = vrot.lane.b32.xlu0 %v79, 2
    %v210 = vpop.permute.xlu0 %209
    %211 = vrot.lane.b32.xlu0 %v80, 2
    %v212 = vpop.permute.xlu0 %211
    %213 = vrot.lane.b32.xlu0 %v81, 2
    %v214 = vpop.permute.xlu0 %213
    %215 = vrot.lane.b32.xlu0 %v82, 2
    %v216 = vpop.permute.xlu0 %215
    %217 = vrot.lane.b32.xlu0 %v83, 2
    %v218 = vpop.permute.xlu0 %217
    %219 = vrot.lane.b32.xlu0 %v84, 2
    %v220 = vpop.permute.xlu0 %219
    %221 = vrot.lane.b32.xlu0 %v85, 2
    %v222 = vpop.permute.xlu0 %221
    %223 = vrot.lane.b32.xlu0 %v86, 2
    %v224 = vpop.permute.xlu0 %223
    %225 = vrot.lane.b32.xlu0 %v87, 2
    %v226 = vpop.permute.xlu0 %225
    %227 = vrot.lane.b32.xlu0 %v88, 2
    %v228 = vpop.permute.xlu0 %227
    %229 = vrot.lane.b32.xlu0 %v89, 2
    %v230 = vpop.permute.xlu0 %229
    %231 = vrot.lane.b32.xlu0 %v90, 2
    %v232 = vpop.permute.xlu0 %231
    %233 = vrot.lane.b32.xlu0 %v91, 2
    %v234 = vpop.permute.xlu0 %233
    %235 = vrot.lane.b32.xlu0 %v92, 2
    %v236 = vpop.permute.xlu0 %235
    %v237 = vsub.f32 %v157, %v40
    %v238 = vsub.f32 %v158, %v41
    %v239 = vsub.f32 %v159, %v42
    %v240 = vsub.f32 %v160, %v43
    %v241 = vsub.f32 %v161, %v44
    %v242 = vsub.f32 %v162, %v45
    %v243 = vsub.f32 %v163, %v46
    %v244 = vsub.f32 %v164, %v47
    %v245 = vsub.f32 %v165, %v48
    %v246 = vsub.f32 %v166, %v49
    %v247 = vsub.f32 %v167, %v50
    %v248 = vsub.f32 %v168, %v51
    %v249 = vsub.f32 %v169, %v52
    %v250 = vsub.f32 %v170, %v53
    %v251 = vsub.f32 %v171, %v54
    %v252 = vsub.f32 %v172, %v55
    %v253 = vsub.f32 %v40, %v157
    %v254 = vsub.f32 %v41, %v158
    %v255 = vsub.f32 %v42, %v159
    %v256 = vsub.f32 %v43, %v160
    %v257 = vsub.f32 %v44, %v161
    %v258 = vsub.f32 %v45, %v162
    %v259 = vsub.f32 %v46, %v163
    %v260 = vsub.f32 %v47, %v164
    %v261 = vsub.f32 %v48, %v165
    %v262 = vsub.f32 %v49, %v166
    %v263 = vsub.f32 %v50, %v167
    %v264 = vsub.f32 %v51, %v168
    %v265 = vsub.f32 %v52, %v169
    %v266 = vsub.f32 %v53, %v170
    %v267 = vsub.f32 %v54, %v171
    %v268 = vsub.f32 %v55, %v172
    %v269 = vsel %vm75, %v237, %v253
    %v270 = vsel %vm75, %v238, %v254
    %v271 = vsel %vm75, %v239, %v255
    %v272 = vsel %vm75, %v240, %v256
    %v273 = vsel %vm75, %v241, %v257
    %v274 = vsel %vm75, %v242, %v258
    %v275 = vsel %vm75, %v243, %v259
    %v276 = vsel %vm75, %v244, %v260
    %v277 = vsel %vm75, %v245, %v261
    %v278 = vsel %vm75, %v246, %v262
    %v279 = vsel %vm75, %v247, %v263
    %v280 = vsel %vm75, %v248, %v264
    %v281 = vsel %vm75, %v249, %v265
    %v282 = vsel %vm75, %v250, %v266
    %v283 = vsel %vm75, %v251, %v267
    %v284 = vsel %vm75, %v252, %v268
    %v285 = vsel %vm75, %v40, %v126
    %v286 = vsel %vm75, %v41, %v128
    %v287 = vsel %vm75, %v42, %v130
    %v288 = vsel %vm75, %v43, %v132
    %v289 = vsel %vm75, %v44, %v134
    %v290 = vsel %vm75, %v45, %v136
    %v291 = vsel %vm75, %v46, %v138
    %v292 = vsel %vm75, %v47, %v140
    %v293 = vsel %vm75, %v48, %v142
    %v294 = vsel %vm75, %v49, %v144
    %v295 = vsel %vm75, %v50, %v146
    %v296 = vsel %vm75, %v51, %v148
    %v297 = vsel %vm75, %v52, %v150
    %v298 = vsel %vm75, %v53, %v152
    %v299 = vsel %vm75, %v54, %v154
    %v300 = vsel %vm75, %v55, %v156
    %v301 = vmul.f32 %v269, 0.5
    %v302 = vmul.f32 %v270, 0.5
    %v303 = vmul.f32 %v271, 0.5
    %v304 = vmul.f32 %v272, 0.5
    %v305 = vmul.f32 %v273, 0.5
    %v306 = vmul.f32 %v274, 0.5
    %v307 = vmul.f32 %v275, 0.5
    %v308 = vmul.f32 %v276, 0.5
    %v309 = vmul.f32 %v277, 0.5
    %v310 = vmul.f32 %v278, 0.5
    %v311 = vmul.f32 %v279, 0.5
    %v312 = vmul.f32 %v280, 0.5
    %v313 = vmul.f32 %v281, 0.5
    %v314 = vmul.f32 %v282, 0.5
    %v315 = vmul.f32 %v283, 0.5
    %v316 = vmul.f32 %v284, 0.5
    %v317 = vadd.f32 %v285, %v301
    %v318 = vadd.f32 %v286, %v302
    %v319 = vadd.f32 %v287, %v303
    %v320 = vadd.f32 %v288, %v304
    %v321 = vadd.f32 %v289, %v305
    %v322 = vadd.f32 %v290, %v306
    %v323 = vadd.f32 %v291, %v307
    %v324 = vadd.f32 %v292, %v308
    %v325 = vadd.f32 %v293, %v309
    %v326 = vadd.f32 %v294, %v310
    %v327 = vadd.f32 %v295, %v311
    %v328 = vadd.f32 %v296, %v312
    %v329 = vadd.f32 %v297, %v313
    %v330 = vadd.f32 %v298, %v314
    %v331 = vadd.f32 %v299, %v315
    %v332 = vadd.f32 %v300, %v316
    %v333 = vsel %vm75, %v77, %v206
    %v334 = vsel %vm75, %v78, %v208
    %v335 = vsel %vm75, %v79, %v210
    %v336 = vsel %vm75, %v80, %v212
    %v337 = vsel %vm75, %v81, %v214
    %v338 = vsel %vm75, %v82, %v216
    %v339 = vsel %vm75, %v83, %v218
    %v340 = vsel %vm75, %v84, %v220
    %v341 = vsel %vm75, %v85, %v222
    %v342 = vsel %vm75, %v86, %v224
    %v343 = vsel %vm75, %v87, %v226
    %v344 = vsel %vm75, %v88, %v228
    %v345 = vsel %vm75, %v89, %v230
    %v346 = vsel %vm75, %v90, %v232
    %v347 = vsel %vm75, %v91, %v234
    %v348 = vsel %vm75, %v92, %v236
    %v349 = vsel %vm75, %v174, %v77
    %v350 = vsel %vm75, %v176, %v78
    %v351 = vsel %vm75, %v178, %v79
    %v352 = vsel %vm75, %v180, %v80
    %v353 = vsel %vm75, %v182, %v81
    %v354 = vsel %vm75, %v184, %v82
    %v355 = vsel %vm75, %v186, %v83
    %v356 = vsel %vm75, %v188, %v84
    %v357 = vsel %vm75, %v190, %v85
    %v358 = vsel %vm75, %v192, %v86
    %v359 = vsel %vm75, %v194, %v87
    %v360 = vsel %vm75, %v196, %v88
    %v361 = vsel %vm75, %v198, %v89
    %v362 = vsel %vm75, %v200, %v90
    %v363 = vsel %vm75, %v202, %v91
    %v364 = vsel %vm75, %v204, %v92
    %v365 = vmul.f32 %v333, %v269
    %v366 = vmul.f32 %v334, %v270
    %v367 = vmul.f32 %v335, %v271
    %v368 = vmul.f32 %v336, %v272
    %v369 = vmul.f32 %v337, %v273
    %v370 = vmul.f32 %v338, %v274
    %v371 = vmul.f32 %v339, %v275
    %v372 = vmul.f32 %v340, %v276
    %v373 = vmul.f32 %v341, %v277
    %v374 = vmul.f32 %v342, %v278
    %v375 = vmul.f32 %v343, %v279
    %v376 = vmul.f32 %v344, %v280
    %v377 = vmul.f32 %v345, %v281
    %v378 = vmul.f32 %v346, %v282
    %v379 = vmul.f32 %v347, %v283
    %v380 = vmul.f32 %v348, %v284
    %v381 = vadd.f32 %v317, %v365
    %v382 = vadd.f32 %v318, %v366
    %v383 = vadd.f32 %v319, %v367
    %v384 = vadd.f32 %v320, %v368
    %v385 = vadd.f32 %v321, %v369
    %v386 = vadd.f32 %v322, %v370
    %v387 = vadd.f32 %v323, %v371
    %v388 = vadd.f32 %v324, %v372
    %v389 = vadd.f32 %v325, %v373
    %v390 = vadd.f32 %v326, %v374
    %v391 = vadd.f32 %v327, %v375
    %v392 = vadd.f32 %v328, %v376
    %v393 = vadd.f32 %v329, %v377
    %v394 = vadd.f32 %v330, %v378
    %v395 = vadd.f32 %v331, %v379
    %v396 = vadd.f32 %v332, %v380
    %v397 = vmul.f32 %v349, 1.442695
    %v398 = vpow.pop %v397
    %v399 = vmul.f32 %v350, 1.442695
    %v400 = vpow.pop %v399
    %v401 = vmul.f32 %v351, 1.442695
    %v402 = vpow.pop %v401
    %v403 = vmul.f32 %v352, 1.442695
    %v404 = vpow.pop %v403
    %v405 = vmul.f32 %v353, 1.442695
    %v406 = vpow.pop %v405
    %v407 = vmul.f32 %v354, 1.442695
    %v408 = vpow.pop %v407
    %v409 = vmul.f32 %v355, 1.442695
    %v410 = vpow.pop %v409
    %v411 = vmul.f32 %v356, 1.442695
    %v412 = vpow.pop %v411
    %v413 = vmul.f32 %v357, 1.442695
    %v414 = vpow.pop %v413
    %v415 = vmul.f32 %v358, 1.442695
    %v416 = vpow.pop %v415
    %v417 = vmul.f32 %v359, 1.442695
    %v418 = vpow.pop %v417
    %v419 = vmul.f32 %v360, 1.442695
    %v420 = vpow.pop %v419
    %v421 = vmul.f32 %v361, 1.442695
    %v422 = vpow.pop %v421
    %v423 = vmul.f32 %v362, 1.442695
    %v424 = vpow.pop %v423
    %v425 = vmul.f32 %v363, 1.442695
    %v426 = vpow.pop %v425
    %v427 = vmul.f32 %v364, 1.442695
    %v428 = vpow.pop %v427
    %v429 = vmul.f32 %v398, %v269
    %v430 = vmul.f32 %v400, %v270
    %v431 = vmul.f32 %v402, %v271
    %v432 = vmul.f32 %v404, %v272
    %v433 = vmul.f32 %v406, %v273
    %v434 = vmul.f32 %v408, %v274
    %v435 = vmul.f32 %v410, %v275
    %v436 = vmul.f32 %v412, %v276
    %v437 = vmul.f32 %v414, %v277
    %v438 = vmul.f32 %v416, %v278
    %v439 = vmul.f32 %v418, %v279
    %v440 = vmul.f32 %v420, %v280
    %v441 = vmul.f32 %v422, %v281
    %v442 = vmul.f32 %v424, %v282
    %v443 = vmul.f32 %v426, %v283
    %v444 = vmul.f32 %v428, %v284
    %v445 = vsel %vm75, -0.5, 0.5
    %v446 = vmul.f32 %v445, %v429
    %v447 = vmul.f32 %v445, %v430
    %v448 = vmul.f32 %v445, %v431
    %v449 = vmul.f32 %v445, %v432
    %v450 = vmul.f32 %v445, %v433
    %v451 = vmul.f32 %v445, %v434
    %v452 = vmul.f32 %v445, %v435
    %v453 = vmul.f32 %v445, %v436
    %v454 = vmul.f32 %v445, %v437
    %v455 = vmul.f32 %v445, %v438
    %v456 = vmul.f32 %v445, %v439
    %v457 = vmul.f32 %v445, %v440
    %v458 = vmul.f32 %v445, %v441
    %v459 = vmul.f32 %v445, %v442
    %v460 = vmul.f32 %v445, %v443
    %v461 = vmul.f32 %v445, %v444
    %v462 = vadd.f32 %v381, %v446
    %v463 = vadd.f32 %v382, %v447
    %v464 = vadd.f32 %v383, %v448
    %v465 = vadd.f32 %v384, %v449
    %v466 = vadd.f32 %v385, %v450
    %v467 = vadd.f32 %v386, %v451
    %v468 = vadd.f32 %v387, %v452
    %v469 = vadd.f32 %v388, %v453
    %v470 = vadd.f32 %v389, %v454
    %v471 = vadd.f32 %v390, %v455
    %v472 = vadd.f32 %v391, %v456
    %v473 = vadd.f32 %v392, %v457
    %v474 = vadd.f32 %v393, %v458
    %v475 = vadd.f32 %v394, %v459
    %v476 = vadd.f32 %v395, %v460
    %v477 = vadd.f32 %v396, %v461
    %478 = vst [vmem:[#allocation7] sm:$0xff] %v462
    %479 = vst [vmem:[#allocation7 + $0x8] sm:$0xff] %v463
    %480 = vst [vmem:[#allocation7 + $0x10] sm:$0xff] %v464
    %481 = vst [vmem:[#allocation7 + $0x18] sm:$0xff] %v465
    %482 = vst [vmem:[#allocation7 + $0x20] sm:$0xff] %v466
    %483 = vst [vmem:[#allocation7 + $0x28] sm:$0xff] %v467
    %484 = vst [vmem:[#allocation7 + $0x30] sm:$0xff] %v468
    %485 = vst [vmem:[#allocation7 + $0x38] sm:$0xff] %v469
    %486 = vst [vmem:[#allocation7 + $0x40] sm:$0xff] %v470
    %487 = vst [vmem:[#allocation7 + $0x48] sm:$0xff] %v471
    %488 = vst [vmem:[#allocation7 + $0x50] sm:$0xff] %v472
    %489 = vst [vmem:[#allocation7 + $0x58] sm:$0xff] %v473
    %490 = vst [vmem:[#allocation7 + $0x60] sm:$0xff] %v474
    %491 = vst [vmem:[#allocation7 + $0x68] sm:$0xff] %v475
    %492 = vst [vmem:[#allocation7 + $0x70] sm:$0xff] %v476
    %493 = vst [vmem:[#allocation7 + $0x78] sm:$0xff] %v477
    // Predicated region
    $region18: #{tpu_custom_call.1} parent=1 // pred_check
      _
    $region19: #{tpu_custom_call.1} parent=1 // pred_check_branch
      %495 = sbr.rel (0) target = $region21
    $region20: #{tpu_custom_call.1} parent=1 // pred_region
      %s497 = ssub.s32 2048, 2048
      %498 = vsyncadd [#allocation4], %s497
      %s499 = sshll.u32 [#allocation7], 4
      %s500 = int_to_ptr.vmem [resolvable:$true] %s499
      %505 = dma.vmem_to_hbm [thread:$0]  %s500, 2048, %s2, [#allocation4], 128, 128, 8
    $region21: #{tpu_custom_call.1} parent=1 // pred_fallthru
      _
    // Predicated region
    $region22: #{tpu_custom_call.1} parent=1 // pred_check
      _
    $region23: #{tpu_custom_call.1} parent=1 // pred_check_branch
      %507 = sbr.rel (0) target = $region25
    $region24: #{tpu_custom_call.1} parent=1 // pred_region
      %508 = dma.done [#allocation4], 2048
    $region25: #{tpu_custom_call.1} parent=1 // pred_fallthru
      _
    %509 = vsyncpa [#allocation3], 1
    %510 = vsyncpa [#allocation6], 1
    %511 = vsyncpa [#allocation4], 1

</llo_original>
